<compile_context>
chip_gen: v7x
topology: tpu7x:2x2x1
jax: 0.10.0
libtpu: 0.0.40
codegen_flags: <defaults>
</compile_context>

<pallas_src>
import jax
import jax.numpy as jnp
from jax.experimental import pallas as pl
from jax.experimental.pallas import tpu as pltpu

_LANE = 128
_SUBLANE = 8
_NEG_BIG = -1e30  # finite "minus infinity" for padded class logits (avoids NaN)


def _round_up(n, m):
    return ((n + m - 1) // m) * m


def _mlp_kernel(x_ref, w1_ref, b1_ref, w2_ref, b2_ref, out_ref):
    # x_ref:  (TILE_B, D)   bf16   flattened image tile
    # w1_ref: (D, Hp)       bf16   hidden weight (pre-transposed, padded)
    # b1_ref: (1, Hp)       f32
    # w2_ref: (Hp, Cp)      bf16   output weight (pre-transposed, padded)
    # b2_ref: (1, Cp)       f32    (padded classes = -1e30)
    # out_ref:(TILE_B, Cp)  f32    log-probabilities (padded classes sliced off outside)

    # Hidden layer: bf16 MXU matmul, f32 accumulate, then ReLU.
    h = jnp.dot(x_ref[...], w1_ref[...], preferred_element_type=jnp.float32)
    a = jnp.maximum(h + b1_ref[...], 0.0).astype(jnp.bfloat16)

    # Output layer.
    y = jnp.dot(a, w2_ref[...], preferred_element_type=jnp.float32) + b2_ref[...]

    # Numerically stable log_softmax over the (padded) class axis.
    m = jnp.max(y, axis=-1, keepdims=True)
    s = y - m
    lse = jnp.log(jnp.sum(jnp.exp(s), axis=-1, keepdims=True))
    out_ref[...] = (s - lse).astype(out_ref.dtype)


@jax.jit
def mlp_forward(x_nchw, w1_t, b1, w2_t, b2):
    B = x_nchw.shape[0]
    D = w1_t.shape[0]
    H = w1_t.shape[1]
    C = w2_t.shape[1]

    # ---- wrapper-side layout plumbing (kept out of the kernel) ----
    # Flatten NCHW -> (B, D), same row-major order as torch's .view(-1, W*H*C).
    x2d = x_nchw.reshape(B, D)

    # Lane-align hidden and class dims. Zero-padded hidden columns are exact
    # (relu(0)=0 and the matching w2 rows are zero). Padded class logits get a
    # huge negative bias so exp() contributes nothing to the softmax sum.
    Hp = _round_up(H, _LANE)
    Cp = _round_up(C, _LANE)
    w1p = jnp.zeros((D, Hp), jnp.bfloat16).at[:, :H].set(w1_t.astype(jnp.bfloat16))
    b1p = jnp.zeros((1, Hp), jnp.float32).at[:, :H].set(b1.astype(jnp.float32))
    w2p = jnp.zeros((Hp, Cp), jnp.bfloat16).at[:H, :C].set(w2_t.astype(jnp.bfloat16))
    b2p = jnp.full((1, Cp), _NEG_BIG, jnp.float32).at[:, :C].set(b2.astype(jnp.float32))

    # Batch tiling: 512-row tiles hit ~85% of HBM roofline; tiny batches just
    # round up to the sublane multiple so the (8,128) block constraint holds.
    tile_b = 512 if B >= 512 else _round_up(B, _SUBLANE)
    Bp = _round_up(B, tile_b)
    xp = jnp.zeros((Bp, D), jnp.bfloat16).at[:B, :].set(x2d.astype(jnp.bfloat16))

    grid = (Bp // tile_b,)

    cost = pl.CostEstimate(
        flops=2 * Bp * D * Hp + 2 * Bp * Hp * Cp,
        transcendentals=Bp * Cp,
        bytes_accessed=(Bp * D * 2          # x (bf16)
                        + D * Hp * 2        # w1 (bf16)
                        + Hp * Cp * 2       # w2 (bf16)
                        + (Hp + Cp) * 4     # biases
                        + Bp * Cp * 4),     # output (f32)
    )

    out_p = pl.pallas_call(
        _mlp_kernel,
        out_shape=jax.ShapeDtypeStruct((Bp, Cp), jnp.float32),
        grid=grid,
        in_specs=[
            pl.BlockSpec((tile_b, D), lambda i: (i, 0)),  # x: tiled over batch
            pl.BlockSpec((D, Hp), lambda i: (0, 0)),      # weights: VMEM-resident
            pl.BlockSpec((1, Hp), lambda i: (0, 0)),
            pl.BlockSpec((Hp, Cp), lambda i: (0, 0)),
            pl.BlockSpec((1, Cp), lambda i: (0, 0)),
        ],
        out_specs=pl.BlockSpec((tile_b, Cp), lambda i: (i, 0)),
        compiler_params=pltpu.CompilerParams(
            dimension_semantics=("parallel",),   # megacore split on v7x
            vmem_limit_bytes=64 * 1024 * 1024,   # explicit budget (fits v7x's 64 MiB)
        ),
        cost_estimate=cost,
    )(xp, w1p, b1p, w2p, b2p)

    # Drop batch and class padding.
    return out_p[:B, :C]


def init_linear_params(key, in_features, out_features):
    """PyTorch nn.Linear default init: U(-1/sqrt(fan_in), 1/sqrt(fan_in))."""
    kw, kb = jax.random.split(key)
    bound = 1.0 / jnp.sqrt(jnp.float32(in_features))
    # stored already transposed: (in_features, out_features)
    w_t = jax.random.uniform(kw, (in_features, out_features), jnp.float32, -bound, bound)
    b = jax.random.uniform(kb, (out_features,), jnp.float32, -bound, bound)
    return w_t, b


if __name__ == "__main__":
    # Module config: image 16x16, 4 channels, 32 hidden nodes, 10 classes, relu.
    image_width, image_height, color_channels = 16, 16, 4
    n_hidden_nodes, n_classes = 32, 10
    batch = 2
    input_size = image_width * image_height * color_channels  # 1024

    key = jax.random.PRNGKey(0)
    kx, k1, k2 = jax.random.split(key, 3)

    x = jax.random.normal(kx, (batch, color_channels, image_height, image_width), jnp.float32)
    w1_t, b1 = init_linear_params(k1, input_size, n_hidden_nodes)
    w2_t, b2 = init_linear_params(k2, n_hidden_nodes, n_classes)

    out = mlp_forward(x, w1_t, b1, w2_t, b2)
    jax.block_until_ready(out)

    # Sanity vs pure-JAX f32 reference (bf16 matmuls -> loose tolerance).
    x2d = x.reshape(batch, input_size)
    h_ref = jnp.maximum(x2d @ w1_t + b1, 0.0)
    y_ref = h_ref @ w2_t + b2
    ref = jax.nn.log_softmax(y_ref, axis=-1)

    assert out.shape == (batch, n_classes)
    assert jnp.allclose(jnp.exp(out).sum(axis=-1), 1.0, atol=1e-5)
    assert jnp.allclose(out, ref, atol=5e-2, rtol=5e-2)

    print("KERNEL_OK")
</pallas_src>

<mosaic_0001>
module attributes {stable_mosaic.version = 11 : i64} {
  func.func @_mlp_kernel(%arg0: i32, %arg1: memref<8x1024xbf16, #tpu.memory_space<vmem>>, %arg2: memref<1024x128xbf16, #tpu.memory_space<vmem>>, %arg3: memref<1x128xf32, #tpu.memory_space<vmem>>, %arg4: memref<128x128xbf16, #tpu.memory_space<vmem>>, %arg5: memref<1x128xf32, #tpu.memory_space<vmem>>, %arg6: memref<8x128xf32, #tpu.memory_space<vmem>>) attributes {dimension_semantics = [#tpu.dimension_semantics<parallel>], iteration_bounds = array<i64: 1>, scalar_prefetch = 0 : i64, scratch_operands = 0 : i64, tpu.core_type = #tpu.core_type<tc>, window_params = [{transform_indices = @transform_0, window_bounds = array<i64: 8, 1024>}, {pipeline_mode = #tpu.pipeline_mode<synchronous>, transform_indices = @transform_1, window_bounds = array<i64: 1024, 128>}, {pipeline_mode = #tpu.pipeline_mode<synchronous>, transform_indices = @transform_2, window_bounds = array<i64: 1, 128>}, {pipeline_mode = #tpu.pipeline_mode<synchronous>, transform_indices = @transform_3, window_bounds = array<i64: 128, 128>}, {pipeline_mode = #tpu.pipeline_mode<synchronous>, transform_indices = @transform_4, window_bounds = array<i64: 1, 128>}, {transform_indices = @transform_5, window_bounds = array<i64: 8, 128>}]} {
    %c0 = arith.constant 0 : index
    %c0_0 = arith.constant 0 : index
    %0 = vector.load %arg1[%c0, %c0_0] : memref<8x1024xbf16, #tpu.memory_space<vmem>>, vector<8x1024xbf16>
    %c0_1 = arith.constant 0 : index
    %c0_2 = arith.constant 0 : index
    %1 = vector.load %arg2[%c0_1, %c0_2] : memref<1024x128xbf16, #tpu.memory_space<vmem>>, vector<1024x128xbf16>
    %cst = arith.constant dense<0.000000e+00> : vector<8x128xf32>
    %2 = tpu.matmul %0, %1, %cst {dimension_numbers = #tpu.dot_dimension_numbers<[1], [0], [0], [1], [0, 0, 1, 1], [], []>} : vector<8x1024xbf16>, vector<1024x128xbf16>, vector<8x128xf32> -> vector<8x128xf32>
    %c0_3 = arith.constant 0 : index
    %c0_4 = arith.constant 0 : index
    %3 = vector.load %arg3[%c0_3, %c0_4] : memref<1x128xf32, #tpu.memory_space<vmem>>, vector<1x128xf32>
    %4 = vector.broadcast %3 : vector<1x128xf32> to vector<8x128xf32>
    %5 = arith.addf %2, %4 : vector<8x128xf32>
    %cst_5 = arith.constant 0.000000e+00 : f32
    %6 = vector.broadcast %cst_5 : f32 to vector<8x128xf32>
    %7 = arith.maximumf %5, %6 : vector<8x128xf32>
    %8 = arith.truncf %7 : vector<8x128xf32> to vector<8x128xbf16>
    %c0_6 = arith.constant 0 : index
    %c0_7 = arith.constant 0 : index
    %9 = vector.load %arg4[%c0_6, %c0_7] : memref<128x128xbf16, #tpu.memory_space<vmem>>, vector<128x128xbf16>
    %cst_8 = arith.constant dense<0.000000e+00> : vector<8x128xf32>
    %10 = tpu.matmul %8, %9, %cst_8 {dimension_numbers = #tpu.dot_dimension_numbers<[1], [0], [0], [1], [0, 0, 1, 1], [], []>} : vector<8x128xbf16>, vector<128x128xbf16>, vector<8x128xf32> -> vector<8x128xf32>
    %c0_9 = arith.constant 0 : index
    %c0_10 = arith.constant 0 : index
    %11 = vector.load %arg5[%c0_9, %c0_10] : memref<1x128xf32, #tpu.memory_space<vmem>>, vector<1x128xf32>
    %12 = vector.broadcast %11 : vector<1x128xf32> to vector<8x128xf32>
    %13 = arith.addf %10, %12 : vector<8x128xf32>
    %cst_11 = arith.constant dense<0xFF800000> : vector<8xf32>
    %14 = vector.multi_reduction <maximumf>, %13, %cst_11 [1] : vector<8x128xf32> to vector<8xf32>
    %15 = vector.shape_cast %14 : vector<8xf32> to vector<8x1xf32>
    %16 = vector.broadcast %15 : vector<8x1xf32> to vector<8x128xf32>
    %17 = arith.subf %13, %16 : vector<8x128xf32>
    %18 = math.exp %17 : vector<8x128xf32>
    %cst_12 = arith.constant dense<0.000000e+00> : vector<8xf32>
    %19 = vector.multi_reduction <add>, %18, %cst_12 [1] : vector<8x128xf32> to vector<8xf32>
    %20 = vector.shape_cast %19 : vector<8xf32> to vector<8x1xf32>
    %21 = math.log %20 : vector<8x1xf32>
    %22 = vector.broadcast %21 : vector<8x1xf32> to vector<8x128xf32>
    %23 = arith.subf %17, %22 : vector<8x128xf32>
    %c0_13 = arith.constant 0 : index
    %c0_14 = arith.constant 0 : index
    %24 = vector.load %arg6[%c0_13, %c0_14] : memref<8x128xf32, #tpu.memory_space<vmem>>, vector<8x128xf32>
    tpu.vector_store %arg6[%c0_13, %c0_14], %23 {strides = array<i32>} : memref<8x128xf32, #tpu.memory_space<vmem>>, vector<8x128xf32>,
    return
  }
  func.func @transform_0(%arg0: i32) -> (i32, i32) {
    %c0_i32 = arith.constant 0 : i32
    %c0_i32_0 = arith.constant 0 : i32
    return %arg0, %c0_i32 : i32, i32
  }
  func.func @transform_1(%arg0: i32) -> (i32, i32) {
    %c0_i32 = arith.constant 0 : i32
    %c0_i32_0 = arith.constant 0 : i32
    %c0_i32_1 = arith.constant 0 : i32
    return %c0_i32, %c0_i32_0 : i32, i32
  }
  func.func @transform_2(%arg0: i32) -> (i32, i32) {
    %c0_i32 = arith.constant 0 : i32
    %c0_i32_0 = arith.constant 0 : i32
    %c0_i32_1 = arith.constant 0 : i32
    return %c0_i32, %c0_i32_0 : i32, i32
  }
  func.func @transform_3(%arg0: i32) -> (i32, i32) {
    %c0_i32 = arith.constant 0 : i32
    %c0_i32_0 = arith.constant 0 : i32
    %c0_i32_1 = arith.constant 0 : i32
    return %c0_i32, %c0_i32_0 : i32, i32
  }
  func.func @transform_4(%arg0: i32) -> (i32, i32) {
    %c0_i32 = arith.constant 0 : i32
    %c0_i32_0 = arith.constant 0 : i32
    %c0_i32_1 = arith.constant 0 : i32
    return %c0_i32, %c0_i32_0 : i32, i32
  }
  func.func @transform_5(%arg0: i32) -> (i32, i32) {
    %c0_i32 = arith.constant 0 : i32
    %c0_i32_0 = arith.constant 0 : i32
    return %arg0, %c0_i32 : i32, i32
  }
}

</mosaic_0001>

<llo_original>
// kernel: mlp_forward.1
$region0: #{mlp_forward.1}
  #allocation0 [shape = 'u32[]', space=smem, size = 0x4, offset = 0x4, fixed_abs, tag = 'smem constant byte address 0x4 - core index']
  #allocation1 [shape = 'u32[144,128]{1,0:T(1,128)}', space=vmem, size = 0x12000, scoped, tag = 'internal scratch']
  %s0 = inlined_call_operand.hbm [shape: bf16[8,1024], index: 0, kind: input, shape index: {}]
  %s1 = inlined_call_operand.hbm [shape: bf16[1024,128], index: 1, kind: input, shape index: {}]
  %s2 = inlined_call_operand.hbm [shape: f32[1,128], index: 2, kind: input, shape index: {}]
  %s3 = inlined_call_operand.hbm [shape: bf16[128,128], index: 3, kind: input, shape index: {}]
  %s4 = inlined_call_operand.hbm [shape: f32[1,128], index: 4, kind: input, shape index: {}]
  %s5 = inlined_call_operand.hbm [shape: f32[8,128], index: 5, kind: output, shape index: {}]
  %s6 = sld [smem:[#allocation0]]
  $region50: #{mlp_forward.1} parent=0
    _
  %s8 = ssub.s32 1, %s6
  %s9 = scalar_select 0, %s8, %s6
  $region1: #{mlp_forward.1} parent=0
    #allocation2 [shape = 'u8[16384]{0}', space=vmem, size = 0x4000, scoped, tag = 'input window, operand 0, single buffered']
    #allocation3 [shape = 's32[1]{0}', space=sflag, size = 0x4, scoped, tag = 'scoped memory for mlp_forward.1']
    #allocation4 [shape = 's32[1]{0}', space=sflag, size = 0x4, scoped, tag = 'scoped memory for mlp_forward.1']
    #allocation5 [shape = 'u8[262144]{0}', space=vmem, size = 0x40000, scoped, tag = 'input window, operand 1, single buffered']
    #allocation6 [shape = 's32[1]{0}', space=sflag, size = 0x4, scoped, tag = 'scoped memory for mlp_forward.1']
    #allocation7 [shape = 'u8[512]{0}', space=vmem, size = 0x400, scoped, tag = 'input window, operand 2, single buffered']
    #allocation8 [shape = 'u8[32768]{0}', space=vmem, size = 0x8000, scoped, tag = 'input window, operand 3, single buffered']
    #allocation9 [shape = 's32[1]{0}', space=sflag, size = 0x4, scoped, tag = 'scoped memory for mlp_forward.1']
    #allocation10 [shape = 'u8[512]{0}', space=vmem, size = 0x400, scoped, tag = 'input window, operand 4, single buffered']
    #allocation11 [shape = 'u8[4096]{0}', space=vmem, size = 0x1000, scoped, tag = 'output window, operand 0, single buffered']
    %10 = vsyncpa [#allocation3], 0
    %11 = vsyncpa [#allocation6], 0
    %12 = vsyncpa [#allocation9], 0
    %13 = vsyncpa [#allocation4], 0
    // Predicated region
    $region2: #{mlp_forward.1} parent=1 // pred_check
      _
    $region3: #{mlp_forward.1} parent=1 // pred_check_branch
      %15 = sbr.rel (0) target = $region5
    $region4: #{mlp_forward.1} parent=1 // pred_region
      %s17 = ssub.s32 512, 512
      %18 = vsyncadd [#allocation3], %s17
      %s20 = sshll.u32 [#allocation2], 4
      %s21 = int_to_ptr.vmem [resolvable:$true] %s20
      %23 = dma.hbm_to_vmem [thread:$0]  %s0, 512, %s21, [#allocation3]
    $region5: #{mlp_forward.1} parent=1 // pred_fallthru
      _
    // Predicated region
    $region6: #{mlp_forward.1} parent=1 // pred_check
      _
    $region7: #{mlp_forward.1} parent=1 // pred_check_branch
      %25 = sbr.rel (0) target = $region9
    $region8: #{mlp_forward.1} parent=1 // pred_region
      %s27 = ssub.s32 8192, 8192
      %28 = vsyncadd [#allocation6], %s27
      %s29 = sshll.u32 [#allocation5], 4
      %s30 = int_to_ptr.vmem [resolvable:$true] %s29
      %35 = dma.hbm_to_vmem [thread:$0]  %s1, 8192, %s30, [#allocation6], 64, 64, 4
    $region9: #{mlp_forward.1} parent=1 // pred_fallthru
      _
    // Predicated region
    $region10: #{mlp_forward.1} parent=1 // pred_check
      _
    $region11: #{mlp_forward.1} parent=1 // pred_check_branch
      %37 = sbr.rel (0) target = $region13
    $region12: #{mlp_forward.1} parent=1 // pred_region
      %s39 = ssub.s32 16, 16
      %40 = vsyncadd [#allocation6], %s39
      %s42 = sshll.u32 [#allocation7], 4
      %s43 = int_to_ptr.vmem [resolvable:$true] %s42
      %45 = dma.hbm_to_vmem [thread:$0]  %s2, 16, %s43, [#allocation6]
    $region13: #{mlp_forward.1} parent=1 // pred_fallthru
      _
    // Predicated region
    $region14: #{mlp_forward.1} parent=1 // pred_check
      _
    $region15: #{mlp_forward.1} parent=1 // pred_check_branch
      %47 = sbr.rel (0) target = $region17
    $region16: #{mlp_forward.1} parent=1 // pred_region
      %s49 = ssub.s32 1024, 1024
      %50 = vsyncadd [#allocation9], %s49
      %s51 = sshll.u32 [#allocation8], 4
      %s52 = int_to_ptr.vmem [resolvable:$true] %s51
      %57 = dma.hbm_to_vmem [thread:$0]  %s3, 1024, %s52, [#allocation9], 64, 64, 4
    $region17: #{mlp_forward.1} parent=1 // pred_fallthru
      _
    // Predicated region
    $region18: #{mlp_forward.1} parent=1 // pred_check
      _
    $region19: #{mlp_forward.1} parent=1 // pred_check_branch
      %59 = sbr.rel (0) target = $region21
    $region20: #{mlp_forward.1} parent=1 // pred_region
      %s61 = ssub.s32 16, 16
      %62 = vsyncadd [#allocation9], %s61
      %s64 = sshll.u32 [#allocation10], 4
      %s65 = int_to_ptr.vmem [resolvable:$true] %s64
      %67 = dma.hbm_to_vmem [thread:$0]  %s4, 16, %s65, [#allocation9]
    $region21: #{mlp_forward.1} parent=1 // pred_fallthru
      _
    // Predicated region
    $region22: #{mlp_forward.1} parent=1 // pred_check
      _
    $region23: #{mlp_forward.1} parent=1 // pred_check_branch
      %69 = sbr.rel (0) target = $region25
    $region24: #{mlp_forward.1} parent=1 // pred_region
      %70 = dma.done [#allocation3], 512
    $region25: #{mlp_forward.1} parent=1 // pred_fallthru
      _
    // Predicated region
    $region26: #{mlp_forward.1} parent=1 // pred_check
      _
    $region27: #{mlp_forward.1} parent=1 // pred_check_branch
      %72 = sbr.rel (0) target = $region29
    $region28: #{mlp_forward.1} parent=1 // pred_region
      %73 = dma.done [#allocation6], 8192
    $region29: #{mlp_forward.1} parent=1 // pred_fallthru
      _
    // Predicated region
    $region30: #{mlp_forward.1} parent=1 // pred_check
      _
    $region31: #{mlp_forward.1} parent=1 // pred_check_branch
      %75 = sbr.rel (0) target = $region33
    $region32: #{mlp_forward.1} parent=1 // pred_region
      %76 = dma.done [#allocation6], 16
    $region33: #{mlp_forward.1} parent=1 // pred_fallthru
      _
    // Predicated region
    $region34: #{mlp_forward.1} parent=1 // pred_check
      _
    $region35: #{mlp_forward.1} parent=1 // pred_check_branch
      %78 = sbr.rel (0) target = $region37
    $region36: #{mlp_forward.1} parent=1 // pred_region
      %79 = dma.done [#allocation9], 1024
    $region37: #{mlp_forward.1} parent=1 // pred_fallthru
      _
    // Predicated region
    $region38: #{mlp_forward.1} parent=1 // pred_check
      _
    $region39: #{mlp_forward.1} parent=1 // pred_check_branch
      %81 = sbr.rel (0) target = $region41
    $region40: #{mlp_forward.1} parent=1 // pred_region
      %82 = dma.done [#allocation9], 16
    $region41: #{mlp_forward.1} parent=1 // pred_fallthru
      _
    %v84 = vld [vmem:[#allocation2] sm:$0xff]
    %v85 = vld [vmem:[#allocation2 + $0x8] sm:$0xff]
    %v86 = vld [vmem:[#allocation2 + $0x10] sm:$0xff]
    %v87 = vld [vmem:[#allocation2 + $0x18] sm:$0xff]
    %v88 = vld [vmem:[#allocation5] sm:$0xf]
    %v89 = vld [vmem:[#allocation5 + $0x4] sm:$0xf]
    %v90 = vld [vmem:[#allocation5 + $0x8] sm:$0xf]
    %v91 = vld [vmem:[#allocation5 + $0xc] sm:$0xf]
    %v92 = vld [vmem:[#allocation5 + $0x10] sm:$0xf]
    %v93 = vld [vmem:[#allocation5 + $0x14] sm:$0xf]
    %v94 = vld [vmem:[#allocation5 + $0x18] sm:$0xf]
    %v95 = vld [vmem:[#allocation5 + $0x1c] sm:$0xf]
    %v96 = vld [vmem:[#allocation5 + $0x20] sm:$0xf]
    %v97 = vld [vmem:[#allocation5 + $0x24] sm:$0xf]
    %v98 = vld [vmem:[#allocation5 + $0x28] sm:$0xf]
    %v99 = vld [vmem:[#allocation5 + $0x2c] sm:$0xf]
    %v100 = vld [vmem:[#allocation5 + $0x30] sm:$0xf]
    %v101 = vld [vmem:[#allocation5 + $0x34] sm:$0xf]
    %v102 = vld [vmem:[#allocation5 + $0x38] sm:$0xf]
    %v103 = vld [vmem:[#allocation5 + $0x3c] sm:$0xf]
    %v104 = vld [vmem:[#allocation5 + $0x40] sm:$0xf]
    %v105 = vld [vmem:[#allocation5 + $0x44] sm:$0xf]
    %v106 = vld [vmem:[#allocation5 + $0x48] sm:$0xf]
    %v107 = vld [vmem:[#allocation5 + $0x4c] sm:$0xf]
    %v108 = vld [vmem:[#allocation5 + $0x50] sm:$0xf]
    %v109 = vld [vmem:[#allocation5 + $0x54] sm:$0xf]
    %v110 = vld [vmem:[#allocation5 + $0x58] sm:$0xf]
    %v111 = vld [vmem:[#allocation5 + $0x5c] sm:$0xf]
    %v112 = vld [vmem:[#allocation5 + $0x60] sm:$0xf]
    %v113 = vld [vmem:[#allocation5 + $0x64] sm:$0xf]
    %v114 = vld [vmem:[#allocation5 + $0x68] sm:$0xf]
    %v115 = vld [vmem:[#allocation5 + $0x6c] sm:$0xf]
    %v116 = vld [vmem:[#allocation5 + $0x70] sm:$0xf]
    %v117 = vld [vmem:[#allocation5 + $0x74] sm:$0xf]
    %v118 = vld [vmem:[#allocation5 + $0x78] sm:$0xf]
    %v119 = vld [vmem:[#allocation5 + $0x7c] sm:$0xf]
    %v120 = vld [vmem:[#allocation5 + $0x80] sm:$0xf]
    %v121 = vld [vmem:[#allocation5 + $0x84] sm:$0xf]
    %v122 = vld [vmem:[#allocation5 + $0x88] sm:$0xf]
    %v123 = vld [vmem:[#allocation5 + $0x8c] sm:$0xf]
    %v124 = vld [vmem:[#allocation5 + $0x90] sm:$0xf]
    %v125 = vld [vmem:[#allocation5 + $0x94] sm:$0xf]
    %v126 = vld [vmem:[#allocation5 + $0x98] sm:$0xf]
    %v127 = vld [vmem:[#allocation5 + $0x9c] sm:$0xf]
    %v128 = vld [vmem:[#allocation5 + $0xa0] sm:$0xf]
    %v129 = vld [vmem:[#allocation5 + $0xa4] sm:$0xf]
    %v130 = vld [vmem:[#allocation5 + $0xa8] sm:$0xf]
    %v131 = vld [vmem:[#allocation5 + $0xac] sm:$0xf]
    %v132 = vld [vmem:[#allocation5 + $0xb0] sm:$0xf]
    %v133 = vld [vmem:[#allocation5 + $0xb4] sm:$0xf]
    %v134 = vld [vmem:[#allocation5 + $0xb8] sm:$0xf]
    %v135 = vld [vmem:[#allocation5 + $0xbc] sm:$0xf]
    %v136 = vld [vmem:[#allocation5 + $0xc0] sm:$0xf]
    %v137 = vld [vmem:[#allocation5 + $0xc4] sm:$0xf]
    %v138 = vld [vmem:[#allocation5 + $0xc8] sm:$0xf]
    %v139 = vld [vmem:[#allocation5 + $0xcc] sm:$0xf]
    %v140 = vld [vmem:[#allocation5 + $0xd0] sm:$0xf]
    %v141 = vld [vmem:[#allocation5 + $0xd4] sm:$0xf]
    %v142 = vld [vmem:[#allocation5 + $0xd8] sm:$0xf]
    %v143 = vld [vmem:[#allocation5 + $0xdc] sm:$0xf]
    %v144 = vld [vmem:[#allocation5 + $0xe0] sm:$0xf]
    %v145 = vld [vmem:[#allocation5 + $0xe4] sm:$0xf]
    %v146 = vld [vmem:[#allocation5 + $0xe8] sm:$0xf]
    %v147 = vld [vmem:[#allocation5 + $0xec] sm:$0xf]
    %v148 = vld [vmem:[#allocation5 + $0xf0] sm:$0xf]
    %v149 = vld [vmem:[#allocation5 + $0xf4] sm:$0xf]
    %v150 = vld [vmem:[#allocation5 + $0xf8] sm:$0xf]
    %v151 = vld [vmem:[#allocation5 + $0xfc] sm:$0xf]
    %v152 = vld [vmem:[#allocation5 + $0x100] sm:$0xf]
    %v153 = vld [vmem:[#allocation5 + $0x104] sm:$0xf]
    %v154 = vld [vmem:[#allocation5 + $0x108] sm:$0xf]
    %v155 = vld [vmem:[#allocation5 + $0x10c] sm:$0xf]
    %v156 = vld [vmem:[#allocation5 + $0x110] sm:$0xf]
    %v157 = vld [vmem:[#allocation5 + $0x114] sm:$0xf]
    %v158 = vld [vmem:[#allocation5 + $0x118] sm:$0xf]
    %v159 = vld [vmem:[#allocation5 + $0x11c] sm:$0xf]
    %v160 = vld [vmem:[#allocation5 + $0x120] sm:$0xf]
    %v161 = vld [vmem:[#allocation5 + $0x124] sm:$0xf]
    %v162 = vld [vmem:[#allocation5 + $0x128] sm:$0xf]
    %v163 = vld [vmem:[#allocation5 + $0x12c] sm:$0xf]
    %v164 = vld [vmem:[#allocation5 + $0x130] sm:$0xf]
    %v165 = vld [vmem:[#allocation5 + $0x134] sm:$0xf]
    %v166 = vld [vmem:[#allocation5 + $0x138] sm:$0xf]
    %v167 = vld [vmem:[#allocation5 + $0x13c] sm:$0xf]
    %v168 = vld [vmem:[#allocation5 + $0x140] sm:$0xf]
    %v169 = vld [vmem:[#allocation5 + $0x144] sm:$0xf]
    %v170 = vld [vmem:[#allocation5 + $0x148] sm:$0xf]
    %v171 = vld [vmem:[#allocation5 + $0x14c] sm:$0xf]
    %v172 = vld [vmem:[#allocation5 + $0x150] sm:$0xf]
    %v173 = vld [vmem:[#allocation5 + $0x154] sm:$0xf]
    %v174 = vld [vmem:[#allocation5 + $0x158] sm:$0xf]
    %v175 = vld [vmem:[#allocation5 + $0x15c] sm:$0xf]
    %v176 = vld [vmem:[#allocation5 + $0x160] sm:$0xf]
    %v177 = vld [vmem:[#allocation5 + $0x164] sm:$0xf]
    %v178 = vld [vmem:[#allocation5 + $0x168] sm:$0xf]
    %v179 = vld [vmem:[#allocation5 + $0x16c] sm:$0xf]
    %v180 = vld [vmem:[#allocation5 + $0x170] sm:$0xf]
    %v181 = vld [vmem:[#allocation5 + $0x174] sm:$0xf]
    %v182 = vld [vmem:[#allocation5 + $0x178] sm:$0xf]
    %v183 = vld [vmem:[#allocation5 + $0x17c] sm:$0xf]
    %v184 = vld [vmem:[#allocation5 + $0x180] sm:$0xf]
    %v185 = vld [vmem:[#allocation5 + $0x184] sm:$0xf]
    %v186 = vld [vmem:[#allocation5 + $0x188] sm:$0xf]
    %v187 = vld [vmem:[#allocation5 + $0x18c] sm:$0xf]
    %v188 = vld [vmem:[#allocation5 + $0x190] sm:$0xf]
    %v189 = vld [vmem:[#allocation5 + $0x194] sm:$0xf]
    %v190 = vld [vmem:[#allocation5 + $0x198] sm:$0xf]
    %v191 = vld [vmem:[#allocation5 + $0x19c] sm:$0xf]
    %v192 = vld [vmem:[#allocation5 + $0x1a0] sm:$0xf]
    %v193 = vld [vmem:[#allocation5 + $0x1a4] sm:$0xf]
    %v194 = vld [vmem:[#allocation5 + $0x1a8] sm:$0xf]
    %v195 = vld [vmem:[#allocation5 + $0x1ac] sm:$0xf]
    %v196 = vld [vmem:[#allocation5 + $0x1b0] sm:$0xf]
    %v197 = vld [vmem:[#allocation5 + $0x1b4] sm:$0xf]
    %v198 = vld [vmem:[#allocation5 + $0x1b8] sm:$0xf]
    %v199 = vld [vmem:[#allocation5 + $0x1bc] sm:$0xf]
    %v200 = vld [vmem:[#allocation5 + $0x1c0] sm:$0xf]
    %v201 = vld [vmem:[#allocation5 + $0x1c4] sm:$0xf]
    %v202 = vld [vmem:[#allocation5 + $0x1c8] sm:$0xf]
    %v203 = vld [vmem:[#allocation5 + $0x1cc] sm:$0xf]
    %v204 = vld [vmem:[#allocation5 + $0x1d0] sm:$0xf]
    %v205 = vld [vmem:[#allocation5 + $0x1d4] sm:$0xf]
    %v206 = vld [vmem:[#allocation5 + $0x1d8] sm:$0xf]
    %v207 = vld [vmem:[#allocation5 + $0x1dc] sm:$0xf]
    %v208 = vld [vmem:[#allocation5 + $0x1e0] sm:$0xf]
    %v209 = vld [vmem:[#allocation5 + $0x1e4] sm:$0xf]
    %v210 = vld [vmem:[#allocation5 + $0x1e8] sm:$0xf]
    %v211 = vld [vmem:[#allocation5 + $0x1ec] sm:$0xf]
    %v212 = vld [vmem:[#allocation5 + $0x1f0] sm:$0xf]
    %v213 = vld [vmem:[#allocation5 + $0x1f4] sm:$0xf]
    %v214 = vld [vmem:[#allocation5 + $0x1f8] sm:$0xf]
    %v215 = vld [vmem:[#allocation5 + $0x1fc] sm:$0xf]
    %v216 = vld [vmem:[#allocation7] sm:$0x1]
    %v218 = vlaneseq
    %v219 = vshrl.u32 %v218, 7
    %v220 = vsub.s32 0, %v219
    %v221 = vrot.slane %v216, %v220
    %v227 = vunpack.c.l.b16 %v84
    %v228 = vunpack.c.h.b16 %v84
    %v229 = vunpack.c.l.b16 %v85
    %v230 = vunpack.c.h.b16 %v85
    %v231 = vunpack.c.l.b16 %v86
    %v232 = vunpack.c.h.b16 %v86
    %v233 = vunpack.c.l.b16 %v87
    %v234 = vunpack.c.h.b16 %v87
    %v235 = vpack.c.b16 %v227, %v227
    %v236 = vpack.c.b16 %v228, %v228
    %v237 = vpack.c.b16 %v229, %v229
    %v238 = vpack.c.b16 %v230, %v230
    %v239 = vpack.c.b16 %v231, %v231
    %v240 = vpack.c.b16 %v232, %v232
    %v241 = vpack.c.b16 %v233, %v233
    %v242 = vpack.c.b16 %v234, %v234
    %v379 = vunpack.c.l.b16 %v88
    %v380 = vunpack.c.l.b16 %v89
    %v381 = vunpack.c.l.b16 %v90
    %v382 = vunpack.c.l.b16 %v91
    %v383 = vunpack.c.l.b16 %v92
    %v384 = vunpack.c.l.b16 %v93
    %v385 = vunpack.c.l.b16 %v94
    %v386 = vunpack.c.l.b16 %v95
    %v387 = vunpack.c.l.b16 %v96
    %v388 = vunpack.c.l.b16 %v97
    %v389 = vunpack.c.l.b16 %v98
    %v390 = vunpack.c.l.b16 %v99
    %v391 = vunpack.c.l.b16 %v100
    %v392 = vunpack.c.l.b16 %v101
    %v393 = vunpack.c.l.b16 %v102
    %v394 = vunpack.c.l.b16 %v103
    %v395 = vunpack.c.l.b16 %v104
    %v396 = vunpack.c.l.b16 %v105
    %v397 = vunpack.c.l.b16 %v106
    %v398 = vunpack.c.l.b16 %v107
    %v399 = vunpack.c.l.b16 %v108
    %v400 = vunpack.c.l.b16 %v109
    %v401 = vunpack.c.l.b16 %v110
    %v402 = vunpack.c.l.b16 %v111
    %v403 = vunpack.c.l.b16 %v112
    %v404 = vunpack.c.l.b16 %v113
    %v405 = vunpack.c.l.b16 %v114
    %v406 = vunpack.c.l.b16 %v115
    %v407 = vunpack.c.l.b16 %v116
    %v408 = vunpack.c.l.b16 %v117
    %v409 = vunpack.c.l.b16 %v118
    %v410 = vunpack.c.l.b16 %v119
    %v411 = vunpack.c.l.b16 %v120
    %v412 = vunpack.c.l.b16 %v121
    %v413 = vunpack.c.l.b16 %v122
    %v414 = vunpack.c.l.b16 %v123
    %v415 = vunpack.c.l.b16 %v124
    %v416 = vunpack.c.l.b16 %v125
    %v417 = vunpack.c.l.b16 %v126
    %v418 = vunpack.c.l.b16 %v127
    %v419 = vunpack.c.l.b16 %v128
    %v420 = vunpack.c.l.b16 %v129
    %v421 = vunpack.c.l.b16 %v130
    %v422 = vunpack.c.l.b16 %v131
    %v423 = vunpack.c.l.b16 %v132
    %v424 = vunpack.c.l.b16 %v133
    %v425 = vunpack.c.l.b16 %v134
    %v426 = vunpack.c.l.b16 %v135
    %v427 = vunpack.c.l.b16 %v136
    %v428 = vunpack.c.l.b16 %v137
    %v429 = vunpack.c.l.b16 %v138
    %v430 = vunpack.c.l.b16 %v139
    %v431 = vunpack.c.l.b16 %v140
    %v432 = vunpack.c.l.b16 %v141
    %v433 = vunpack.c.l.b16 %v142
    %v434 = vunpack.c.l.b16 %v143
    %v435 = vunpack.c.l.b16 %v144
    %v436 = vunpack.c.l.b16 %v145
    %v437 = vunpack.c.l.b16 %v146
    %v438 = vunpack.c.l.b16 %v147
    %v439 = vunpack.c.l.b16 %v148
    %v440 = vunpack.c.l.b16 %v149
    %v441 = vunpack.c.l.b16 %v150
    %v442 = vunpack.c.l.b16 %v151
    %v443 = vunpack.c.l.b16 %v152
    %v444 = vunpack.c.l.b16 %v153
    %v445 = vunpack.c.l.b16 %v154
    %v446 = vunpack.c.l.b16 %v155
    %v447 = vunpack.c.l.b16 %v156
    %v448 = vunpack.c.l.b16 %v157
    %v449 = vunpack.c.l.b16 %v158
    %v450 = vunpack.c.l.b16 %v159
    %v451 = vunpack.c.l.b16 %v160
    %v452 = vunpack.c.l.b16 %v161
    %v453 = vunpack.c.l.b16 %v162
    %v454 = vunpack.c.l.b16 %v163
    %v455 = vunpack.c.l.b16 %v164
    %v456 = vunpack.c.l.b16 %v165
    %v457 = vunpack.c.l.b16 %v166
    %v458 = vunpack.c.l.b16 %v167
    %v459 = vunpack.c.l.b16 %v168
    %v460 = vunpack.c.l.b16 %v169
    %v461 = vunpack.c.l.b16 %v170
    %v462 = vunpack.c.l.b16 %v171
    %v463 = vunpack.c.l.b16 %v172
    %v464 = vunpack.c.l.b16 %v173
    %v465 = vunpack.c.l.b16 %v174
    %v466 = vunpack.c.l.b16 %v175
    %v467 = vunpack.c.l.b16 %v176
    %v468 = vunpack.c.l.b16 %v177
    %v469 = vunpack.c.l.b16 %v178
    %v470 = vunpack.c.l.b16 %v179
    %v471 = vunpack.c.l.b16 %v180
    %v472 = vunpack.c.l.b16 %v181
    %v473 = vunpack.c.l.b16 %v182
    %v474 = vunpack.c.l.b16 %v183
    %v475 = vunpack.c.l.b16 %v184
    %v476 = vunpack.c.l.b16 %v185
    %v477 = vunpack.c.l.b16 %v186
    %v478 = vunpack.c.l.b16 %v187
    %v479 = vunpack.c.l.b16 %v188
    %v480 = vunpack.c.l.b16 %v189
    %v481 = vunpack.c.l.b16 %v190
    %v482 = vunpack.c.l.b16 %v191
    %v483 = vunpack.c.l.b16 %v192
    %v484 = vunpack.c.l.b16 %v193
    %v485 = vunpack.c.l.b16 %v194
    %v486 = vunpack.c.l.b16 %v195
    %v487 = vunpack.c.l.b16 %v196
    %v488 = vunpack.c.l.b16 %v197
    %v489 = vunpack.c.l.b16 %v198
    %v490 = vunpack.c.l.b16 %v199
    %v491 = vunpack.c.l.b16 %v200
    %v492 = vunpack.c.l.b16 %v201
    %v493 = vunpack.c.l.b16 %v202
    %v494 = vunpack.c.l.b16 %v203
    %v495 = vunpack.c.l.b16 %v204
    %v496 = vunpack.c.l.b16 %v205
    %v497 = vunpack.c.l.b16 %v206
    %v498 = vunpack.c.l.b16 %v207
    %v499 = vunpack.c.l.b16 %v208
    %v500 = vunpack.c.l.b16 %v209
    %v501 = vunpack.c.l.b16 %v210
    %v502 = vunpack.c.l.b16 %v211
    %v503 = vunpack.c.l.b16 %v212
    %v504 = vunpack.c.l.b16 %v213
    %v505 = vunpack.c.l.b16 %v214
    %v506 = vunpack.c.l.b16 %v215
    %v507 = vpack.c.b16 %v380, %v379
    %v508 = vpack.c.b16 %v382, %v381
    %v509 = vpack.c.b16 %v384, %v383
    %v510 = vpack.c.b16 %v386, %v385
    %v511 = vpack.c.b16 %v388, %v387
    %v512 = vpack.c.b16 %v390, %v389
    %v513 = vpack.c.b16 %v392, %v391
    %v514 = vpack.c.b16 %v394, %v393
    %v515 = vpack.c.b16 %v396, %v395
    %v516 = vpack.c.b16 %v398, %v397
    %v517 = vpack.c.b16 %v400, %v399
    %v518 = vpack.c.b16 %v402, %v401
    %v519 = vpack.c.b16 %v404, %v403
    %v520 = vpack.c.b16 %v406, %v405
    %v521 = vpack.c.b16 %v408, %v407
    %v522 = vpack.c.b16 %v410, %v409
    %v523 = vpack.c.b16 %v412, %v411
    %v524 = vpack.c.b16 %v414, %v413
    %v525 = vpack.c.b16 %v416, %v415
    %v526 = vpack.c.b16 %v418, %v417
    %v527 = vpack.c.b16 %v420, %v419
    %v528 = vpack.c.b16 %v422, %v421
    %v529 = vpack.c.b16 %v424, %v423
    %v530 = vpack.c.b16 %v426, %v425
    %v531 = vpack.c.b16 %v428, %v427
    %v532 = vpack.c.b16 %v430, %v429
    %v533 = vpack.c.b16 %v432, %v431
    %v534 = vpack.c.b16 %v434, %v433
    %v535 = vpack.c.b16 %v436, %v435
    %v536 = vpack.c.b16 %v438, %v437
    %v537 = vpack.c.b16 %v440, %v439
    %v538 = vpack.c.b16 %v442, %v441
    %v539 = vpack.c.b16 %v444, %v443
    %v540 = vpack.c.b16 %v446, %v445
    %v541 = vpack.c.b16 %v448, %v447
    %v542 = vpack.c.b16 %v450, %v449
    %v543 = vpack.c.b16 %v452, %v451
    %v544 = vpack.c.b16 %v454, %v453
    %v545 = vpack.c.b16 %v456, %v455
    %v546 = vpack.c.b16 %v458, %v457
    %v547 = vpack.c.b16 %v460, %v459
    %v548 = vpack.c.b16 %v462, %v461
    %v549 = vpack.c.b16 %v464, %v463
    %v550 = vpack.c.b16 %v466, %v465
    %v551 = vpack.c.b16 %v468, %v467
    %v552 = vpack.c.b16 %v470, %v469
    %v553 = vpack.c.b16 %v472, %v471
    %v554 = vpack.c.b16 %v474, %v473
    %v555 = vpack.c.b16 %v476, %v475
    %v556 = vpack.c.b16 %v478, %v477
    %v557 = vpack.c.b16 %v480, %v479
    %v558 = vpack.c.b16 %v482, %v481
    %v559 = vpack.c.b16 %v484, %v483
    %v560 = vpack.c.b16 %v486, %v485
    %v561 = vpack.c.b16 %v488, %v487
    %v562 = vpack.c.b16 %v490, %v489
    %v563 = vpack.c.b16 %v492, %v491
    %v564 = vpack.c.b16 %v494, %v493
    %v565 = vpack.c.b16 %v496, %v495
    %v566 = vpack.c.b16 %v498, %v497
    %v567 = vpack.c.b16 %v500, %v499
    %v568 = vpack.c.b16 %v502, %v501
    %v569 = vpack.c.b16 %v504, %v503
    %v570 = vpack.c.b16 %v506, %v505
    %635 = vmatprep.subr.bf16.mxu0 0
    %636 = vmatpush1.bf16.msra.mxu0 %v507
    %637 = vmatprep.subr.bf16.mxu0 0
    %638 = vmatpush1.bf16.msra.mxu0 %v508
    %639 = vmatprep.subr.bf16.mxu0 0
    %640 = vmatpush1.bf16.msra.mxu0 %v509
    %641 = vmatprep.subr.bf16.mxu0 0
    %642 = vmatpush1.bf16.msra.mxu0 %v510
    %643 = vmatprep.subr.bf16.mxu0 0
    %644 = vmatpush1.bf16.msra.mxu0 %v511
    %645 = vmatprep.subr.bf16.mxu0 0
    %646 = vmatpush1.bf16.msra.mxu0 %v512
    %647 = vmatprep.subr.bf16.mxu0 0
    %648 = vmatpush1.bf16.msra.mxu0 %v513
    %649 = vmatprep.subr.bf16.mxu0 0
    %650 = vmatpush1.bf16.msra.mxu0 %v514
    %651 = vmatprep.subr.bf16.mxu0 0
    %652 = vmatpush1.bf16.msra.mxu0 %v515
    %653 = vmatprep.subr.bf16.mxu0 0
    %654 = vmatpush1.bf16.msra.mxu0 %v516
    %655 = vmatprep.subr.bf16.mxu0 0
    %656 = vmatpush1.bf16.msra.mxu0 %v517
    %657 = vmatprep.subr.bf16.mxu0 0
    %658 = vmatpush1.bf16.msra.mxu0 %v518
    %659 = vmatprep.subr.bf16.mxu0 0
    %660 = vmatpush1.bf16.msra.mxu0 %v519
    %661 = vmatprep.subr.bf16.mxu0 0
    %662 = vmatpush1.bf16.msra.mxu0 %v520
    %663 = vmatprep.subr.bf16.mxu0 0
    %664 = vmatpush1.bf16.msra.mxu0 %v521
    %665 = vmatprep.subr.bf16.mxu0 0
    %666 = vmatpush1.bf16.msra.mxu0 %v522
    %667 = vmatprep.mubr.bf16.mxu0 %v236
    %668 = vmatmul.mubr.bf16.gmra.mrb[0].mxu0 %v235
    %v669 = vpop.f32.mrb[0].mxu0
    %v670 = vadd.f32 %v221, %v669
    %v671 = vpop.f32.mrb[0].mxu0
    %v672 = vpop.f32.mrb[0].mxu0
    %v673 = vpop.f32.mrb[0].mxu0
    %674 = vdwg.mxu0
    %675 = vmatprep.subr.bf16.mxu0 0
    %676 = vmatpush1.bf16.msra.mxu0 %v523
    %677 = vmatprep.subr.bf16.mxu0 0
    %678 = vmatpush1.bf16.msra.mxu0 %v524
    %679 = vmatprep.subr.bf16.mxu0 0
    %680 = vmatpush1.bf16.msra.mxu0 %v525
    %681 = vmatprep.subr.bf16.mxu0 0
    %682 = vmatpush1.bf16.msra.mxu0 %v526
    %683 = vmatprep.subr.bf16.mxu0 0
    %684 = vmatpush1.bf16.msra.mxu0 %v527
    %685 = vmatprep.subr.bf16.mxu0 0
    %686 = vmatpush1.bf16.msra.mxu0 %v528
    %687 = vmatprep.subr.bf16.mxu0 0
    %688 = vmatpush1.bf16.msra.mxu0 %v529
    %689 = vmatprep.subr.bf16.mxu0 0
    %690 = vmatpush1.bf16.msra.mxu0 %v530
    %691 = vmatprep.subr.bf16.mxu0 0
    %692 = vmatpush1.bf16.msra.mxu0 %v531
    %693 = vmatprep.subr.bf16.mxu0 0
    %694 = vmatpush1.bf16.msra.mxu0 %v532
    %695 = vmatprep.subr.bf16.mxu0 0
    %696 = vmatpush1.bf16.msra.mxu0 %v533
    %697 = vmatprep.subr.bf16.mxu0 0
    %698 = vmatpush1.bf16.msra.mxu0 %v534
    %699 = vmatprep.subr.bf16.mxu0 0
    %700 = vmatpush1.bf16.msra.mxu0 %v535
    %701 = vmatprep.subr.bf16.mxu0 0
    %702 = vmatpush1.bf16.msra.mxu0 %v536
    %703 = vmatprep.subr.bf16.mxu0 0
    %704 = vmatpush1.bf16.msra.mxu0 %v537
    %705 = vmatprep.subr.bf16.mxu0 0
    %706 = vmatpush1.bf16.msra.mxu0 %v538
    %707 = vmatprep.mubr.bf16.mxu0 %v238
    %708 = vmatmul.mubr.bf16.gmra.mrb[0].mxu0 %v237
    %v709 = vpop.f32.mrb[0].mxu0
    %v710 = vadd.f32 %v670, %v709
    %v711 = vpop.f32.mrb[0].mxu0
    %v712 = vpop.f32.mrb[0].mxu0
    %v713 = vpop.f32.mrb[0].mxu0
    %714 = vdwg.mxu0
    %715 = vmatprep.subr.bf16.mxu0 0
    %716 = vmatpush1.bf16.msra.mxu0 %v539
    %717 = vmatprep.subr.bf16.mxu0 0
    %718 = vmatpush1.bf16.msra.mxu0 %v540
    %719 = vmatprep.subr.bf16.mxu0 0
    %720 = vmatpush1.bf16.msra.mxu0 %v541
    %721 = vmatprep.subr.bf16.mxu0 0
    %722 = vmatpush1.bf16.msra.mxu0 %v542
    %723 = vmatprep.subr.bf16.mxu0 0
    %724 = vmatpush1.bf16.msra.mxu0 %v543
    %725 = vmatprep.subr.bf16.mxu0 0
    %726 = vmatpush1.bf16.msra.mxu0 %v544
    %727 = vmatprep.subr.bf16.mxu0 0
    %728 = vmatpush1.bf16.msra.mxu0 %v545
    %729 = vmatprep.subr.bf16.mxu0 0
    %730 = vmatpush1.bf16.msra.mxu0 %v546
    %731 = vmatprep.subr.bf16.mxu0 0
    %732 = vmatpush1.bf16.msra.mxu0 %v547
    %733 = vmatprep.subr.bf16.mxu0 0
    %734 = vmatpush1.bf16.msra.mxu0 %v548
    %735 = vmatprep.subr.bf16.mxu0 0
    %736 = vmatpush1.bf16.msra.mxu0 %v549
    %737 = vmatprep.subr.bf16.mxu0 0
    %738 = vmatpush1.bf16.msra.mxu0 %v550
    %739 = vmatprep.subr.bf16.mxu0 0
    %740 = vmatpush1.bf16.msra.mxu0 %v551
    %741 = vmatprep.subr.bf16.mxu0 0
    %742 = vmatpush1.bf16.msra.mxu0 %v552
    %743 = vmatprep.subr.bf16.mxu0 0
    %744 = vmatpush1.bf16.msra.mxu0 %v553
    %745 = vmatprep.subr.bf16.mxu0 0
    %746 = vmatpush1.bf16.msra.mxu0 %v554
    %747 = vmatprep.mubr.bf16.mxu0 %v240
    %748 = vmatmul.mubr.bf16.gmra.mrb[0].mxu0 %v239
    %v749 = vpop.f32.mrb[0].mxu0
    %v750 = vadd.f32 %v710, %v749
    %v751 = vpop.f32.mrb[0].mxu0
    %v752 = vpop.f32.mrb[0].mxu0
    %v753 = vpop.f32.mrb[0].mxu0
    %754 = vdwg.mxu0
    %755 = vmatprep.subr.bf16.mxu0 0
    %756 = vmatpush1.bf16.msra.mxu0 %v555
    %757 = vmatprep.subr.bf16.mxu0 0
    %758 = vmatpush1.bf16.msra.mxu0 %v556
    %759 = vmatprep.subr.bf16.mxu0 0
    %760 = vmatpush1.bf16.msra.mxu0 %v557
    %761 = vmatprep.subr.bf16.mxu0 0
    %762 = vmatpush1.bf16.msra.mxu0 %v558
    %763 = vmatprep.subr.bf16.mxu0 0
    %764 = vmatpush1.bf16.msra.mxu0 %v559
    %765 = vmatprep.subr.bf16.mxu0 0
    %766 = vmatpush1.bf16.msra.mxu0 %v560
    %767 = vmatprep.subr.bf16.mxu0 0
    %768 = vmatpush1.bf16.msra.mxu0 %v561
    %769 = vmatprep.subr.bf16.mxu0 0
    %770 = vmatpush1.bf16.msra.mxu0 %v562
    %771 = vmatprep.subr.bf16.mxu0 0
    %772 = vmatpush1.bf16.msra.mxu0 %v563
    %773 = vmatprep.subr.bf16.mxu0 0
    %774 = vmatpush1.bf16.msra.mxu0 %v564
    %775 = vmatprep.subr.bf16.mxu0 0
    %776 = vmatpush1.bf16.msra.mxu0 %v565
    %777 = vmatprep.subr.bf16.mxu0 0
    %778 = vmatpush1.bf16.msra.mxu0 %v566
    %779 = vmatprep.subr.bf16.mxu0 0
    %780 = vmatpush1.bf16.msra.mxu0 %v567
    %781 = vmatprep.subr.bf16.mxu0 0
    %782 = vmatpush1.bf16.msra.mxu0 %v568
    %783 = vmatprep.subr.bf16.mxu0 0
    %784 = vmatpush1.bf16.msra.mxu0 %v569
    %785 = vmatprep.subr.bf16.mxu0 0
    %786 = vmatpush1.bf16.msra.mxu0 %v570
    %787 = vmatprep.mubr.bf16.mxu0 %v242
    %788 = vmatmul.mubr.bf16.gmra.mrb[0].mxu0 %v241
    %v789 = vpop.f32.mrb[0].mxu0
    %v790 = vadd.f32 %v750, %v789
    %v791 = vpop.f32.mrb[0].mxu0
    %v792 = vpop.f32.mrb[0].mxu0
    %v793 = vpop.f32.mrb[0].mxu0
    %794 = vdwg.mxu0
    %v795 = vmax.f32 %v790, 0.0
    %v796 = vpack.c.bf16 %v795, %v795
    %v797 = vld [vmem:[#allocation8] sm:$0xf]
    %v798 = vld [vmem:[#allocation8 + $0x4] sm:$0xf]
    %v799 = vld [vmem:[#allocation8 + $0x8] sm:$0xf]
    %v800 = vld [vmem:[#allocation8 + $0xc] sm:$0xf]
    %v801 = vld [vmem:[#allocation8 + $0x10] sm:$0xf]
    %v802 = vld [vmem:[#allocation8 + $0x14] sm:$0xf]
    %v803 = vld [vmem:[#allocation8 + $0x18] sm:$0xf]
    %v804 = vld [vmem:[#allocation8 + $0x1c] sm:$0xf]
    %v805 = vld [vmem:[#allocation8 + $0x20] sm:$0xf]
    %v806 = vld [vmem:[#allocation8 + $0x24] sm:$0xf]
    %v807 = vld [vmem:[#allocation8 + $0x28] sm:$0xf]
    %v808 = vld [vmem:[#allocation8 + $0x2c] sm:$0xf]
    %v809 = vld [vmem:[#allocation8 + $0x30] sm:$0xf]
    %v810 = vld [vmem:[#allocation8 + $0x34] sm:$0xf]
    %v811 = vld [vmem:[#allocation8 + $0x38] sm:$0xf]
    %v812 = vld [vmem:[#allocation8 + $0x3c] sm:$0xf]
    %v813 = vld [vmem:[#allocation10] sm:$0x1]
    %v815 = vlaneseq
    %v816 = vshrl.u32 %v815, 7
    %v817 = vsub.s32 0, %v816
    %v818 = vrot.slane %v813, %v817
    %v836 = vunpack.c.l.b16 %v797
    %v837 = vunpack.c.l.b16 %v798
    %v838 = vunpack.c.l.b16 %v799
    %v839 = vunpack.c.l.b16 %v800
    %v840 = vunpack.c.l.b16 %v801
    %v841 = vunpack.c.l.b16 %v802
    %v842 = vunpack.c.l.b16 %v803
    %v843 = vunpack.c.l.b16 %v804
    %v844 = vunpack.c.l.b16 %v805
    %v845 = vunpack.c.l.b16 %v806
    %v846 = vunpack.c.l.b16 %v807
    %v847 = vunpack.c.l.b16 %v808
    %v848 = vunpack.c.l.b16 %v809
    %v849 = vunpack.c.l.b16 %v810
    %v850 = vunpack.c.l.b16 %v811
    %v851 = vunpack.c.l.b16 %v812
    %v852 = vpack.c.b16 %v837, %v836
    %v853 = vpack.c.b16 %v839, %v838
    %v854 = vpack.c.b16 %v841, %v840
    %v855 = vpack.c.b16 %v843, %v842
    %v856 = vpack.c.b16 %v845, %v844
    %v857 = vpack.c.b16 %v847, %v846
    %v858 = vpack.c.b16 %v849, %v848
    %v859 = vpack.c.b16 %v851, %v850
    %868 = vmatprep.subr.bf16.mxu0 0
    %869 = vmatpush1.bf16.msra.mxu0 %v852
    %870 = vmatprep.subr.bf16.mxu0 0
    %871 = vmatpush1.bf16.msra.mxu0 %v853
    %872 = vmatprep.subr.bf16.mxu0 0
    %873 = vmatpush1.bf16.msra.mxu0 %v854
    %874 = vmatprep.subr.bf16.mxu0 0
    %875 = vmatpush1.bf16.msra.mxu0 %v855
    %876 = vmatprep.subr.bf16.mxu0 0
    %877 = vmatpush1.bf16.msra.mxu0 %v856
    %878 = vmatprep.subr.bf16.mxu0 0
    %879 = vmatpush1.bf16.msra.mxu0 %v857
    %880 = vmatprep.subr.bf16.mxu0 0
    %881 = vmatpush1.bf16.msra.mxu0 %v858
    %882 = vmatprep.subr.bf16.mxu0 0
    %883 = vmatpush1.bf16.msra.mxu0 %v859
    %884 = vmatprep.subr.bf16.mxu0 0
    %885 = vmatpush1.bf16.msra.mxu0 0
    %886 = vmatprep.subr.bf16.mxu0 0
    %887 = vmatpush1.bf16.msra.mxu0 0
    %888 = vmatprep.subr.bf16.mxu0 0
    %889 = vmatpush1.bf16.msra.mxu0 0
    %890 = vmatprep.subr.bf16.mxu0 0
    %891 = vmatpush1.bf16.msra.mxu0 0
    %892 = vmatprep.subr.bf16.mxu0 0
    %893 = vmatpush1.bf16.msra.mxu0 0
    %894 = vmatprep.subr.bf16.mxu0 0
    %895 = vmatpush1.bf16.msra.mxu0 0
    %896 = vmatprep.subr.bf16.mxu0 0
    %897 = vmatpush1.bf16.msra.mxu0 0
    %898 = vmatprep.subr.bf16.mxu0 0
    %899 = vmatpush1.bf16.msra.mxu0 0
    %900 = vmatprep.mubr.bf16.mxu0 0
    %901 = vmatmul.mubr.bf16.gmra.mrb[0].mxu0 %v796
    %v902 = vpop.f32.mrb[0].mxu0
    %v903 = vadd.f32 %v818, %v902
    %v904 = vpop.f32.mrb[0].mxu0
    %v905 = vpop.f32.mrb[0].mxu0
    %v906 = vpop.f32.mrb[0].mxu0
    %907 = vdwg.mxu0
    %908 = vmax.xlane.f32.xlu0 %v903
    %v909 = vpop.xlane.xlu0 %908
    %v910 = vsub.f32 %v903, %v909
    %v911 = vmul.f32 %v910, 1.442695
    %v912 = vpow.pop %v911
    %913 = vadd.xlane.f32.xlu0 %v912
    %v914 = vpop.xlane.xlu0 %913
    %v915 = vlog2.pop %v914
    %v916 = vmul.f32 %v915, 0.6931472
    %v917 = vsub.f32 %v910, %v916
    %918 = vst [vmem:[#allocation11] sm:$0xff] %v917
    // Predicated region
    $region42: #{mlp_forward.1} parent=1 // pred_check
      _
    $region43: #{mlp_forward.1} parent=1 // pred_check_branch
      %920 = sbr.rel (0) target = $region45
    $region44: #{mlp_forward.1} parent=1 // pred_region
      %s922 = ssub.s32 128, 128
      %923 = vsyncadd [#allocation4], %s922
      %s925 = sshll.u32 [#allocation11], 4
      %s926 = int_to_ptr.vmem [resolvable:$true] %s925
      %928 = dma.vmem_to_hbm [thread:$0]  %s926, 128, %s5, [#allocation4]
    $region45: #{mlp_forward.1} parent=1 // pred_fallthru
      _
    // Predicated region
    $region46: #{mlp_forward.1} parent=1 // pred_check
      _
    $region47: #{mlp_forward.1} parent=1 // pred_check_branch
      %930 = sbr.rel (0) target = $region49
    $region48: #{mlp_forward.1} parent=1 // pred_region
      %931 = dma.done [#allocation4], 128
    $region49: #{mlp_forward.1} parent=1 // pred_fallthru
      _
    %932 = vsyncpa [#allocation3], 1
    %933 = vsyncpa [#allocation6], 1
    %934 = vsyncpa [#allocation9], 1
    %935 = vsyncpa [#allocation4], 1

</llo_original>
